<compile_context>
chip_gen: v7x
topology: tpu7x:2x2x1
jax: 0.10.0
libtpu: 0.0.40
codegen_flags: <defaults>
</compile_context>

<pallas_src>
import jax
import jax.numpy as jnp
from jax.experimental import pallas as pl
from jax.experimental.pallas import tpu as pltpu


# Conservative per-step VMEM budget (double-buffered tiles + scratch) that fits the
# default scoped VMEM on v5e/v6e/v7x with headroom.
_VMEM_BUDGET_BYTES = 24 * 1024 * 1024
_VMEM_LIMIT_BYTES = 32 * 1024 * 1024  # explicit scoped limit (safe on all generations)
_SMALL_WORK_THRESHOLD = 1 << 21       # B*Din*Dout below this -> plain XLA wins


def _largest_divisor_tile(dim, cap, align):
    """Largest tile <= cap that is a multiple of `align` and divides `dim`.
    Falls back to the full dim (a full-extent block is always a legal shape)."""
    if dim <= cap:
        return dim
    t = (cap // align) * align
    while t >= align:
        if dim % t == 0:
            return t
        t -= align
    return dim


def _make_fused_kernel(apply_relu, n_col_tiles, tn):
    """Collapsed-K kernel: out = act(x @ w + b + residual).

    The residual tile is sliced out of the (tm, Din) LHS x tile (Din == Dout),
    so there is no separate residual input stream and no accumulator scratch.
    """

    def kernel(x_ref, w_ref, b_ref, o_ref):
        acc = jnp.dot(x_ref[...], w_ref[...], preferred_element_type=jnp.float32)
        if n_col_tiles == 1:
            resid = x_ref[...]
        else:
            # tn is a multiple of 128 here, so the lane slice is aligned.
            col = pl.multiple_of(pl.program_id(1) * tn, tn)
            resid = x_ref[:, pl.ds(col, tn)]
        out = acc + b_ref[...].astype(jnp.float32) + resid.astype(jnp.float32)
        if apply_relu:
            out = jnp.maximum(out, 0.0)
        o_ref[...] = out.astype(o_ref.dtype)

    return kernel


def _make_ksplit_kernel(apply_relu):
    """K-split kernel with an f32 VMEM accumulator.

    Bias + residual are folded into the k==0 accumulator init, so the epilogue
    after the final MXU drain is just activation + dtype cast.
    """

    def kernel(x_ref, w_ref, b_ref, r_ref, o_ref, acc_ref):
        k = pl.program_id(2)

        @pl.when(k == 0)
        def _init():
            acc_ref[...] = (
                r_ref[...].astype(jnp.float32) + b_ref[...].astype(jnp.float32)
            )

        acc_ref[...] += jnp.dot(
            x_ref[...], w_ref[...], preferred_element_type=jnp.float32
        )

        @pl.when(k == pl.num_programs(2) - 1)
        def _finalize():
            out = acc_ref[...]
            if apply_relu:
                out = jnp.maximum(out, 0.0)
            o_ref[...] = out.astype(o_ref.dtype)

    return kernel


def residual_block_linear(
    x, w, b, *, activation="relu", tm=None, tn=None, tk=None, use_pallas=None
):
    """ResidualBlock forward with a Linear base_module:  relu(x + x @ w + b).

    Args:
      x: (B, D) input.
      w: (D, D) weight in (in_features, out_features) layout (torch `linear.weight.T`).
      b: (D,) bias.
      activation: 'relu' (ResidualBlock default) or 'none'.
      tm/tn/tk: optional tile-size caps.
      use_pallas: None (auto: small shapes fall back to plain jnp), True, or False.
    """
    B, Din = x.shape
    Dk, Dout = w.shape
    assert Din == Dk, "weight in-features must match x"
    assert Din == Dout, (
        "residual add requires base_module to preserve the feature dim "
        "(resample path not implemented)"
    )
    assert activation in ("relu", "none")
    apply_relu = activation == "relu"
    itemsize = jnp.dtype(x.dtype).itemsize

    def _reference():
        out = jnp.dot(x, w, preferred_element_type=jnp.float32) + b + x
        if apply_relu:
            out = jnp.maximum(out, 0.0)
        return out.astype(x.dtype)

    # Small-shape fast path: a tiny-grid Pallas call is pure fixed overhead.
    if use_pallas is None:
        use_pallas = (B * Din * Dout) >= _SMALL_WORK_THRESHOLD
    if not use_pallas:
        return _reference()

    # --- tile selection (large tiles, budgeted against scoped VMEM) -------------
    tm_cap = tm if tm is not None else 512
    tn_cap = tn if tn is not None else 512
    tk_cap = tk if tk is not None else 1024

    tm = _largest_divisor_tile(B, tm_cap, 8)
    tn = _largest_divisor_tile(Dout, tn_cap, 128)

    def _footprint(tk_sz, collapsed):
        # double-buffered input/output tiles (+ f32 accumulator when K is split)
        fp = 2 * itemsize * (tm * tk_sz + tk_sz * tn + 8 * tn + tm * tn)
        if not collapsed:
            fp += 2 * itemsize * (tm * tn)  # residual input stream
            fp += 4 * tm * tn               # f32 accumulator scratch
        return fp

    collapse_k = _footprint(Din, collapsed=True) <= _VMEM_BUDGET_BYTES
    if not collapse_k:
        tk = _largest_divisor_tile(Din, tk_cap, 128)
        if _footprint(tk, collapsed=False) > _VMEM_BUDGET_BYTES:
            # TODO(synk): very large / non-tileable feature dims would need a
            # padded tiling path; fall back to plain XLA rather than risk VMEM OOM.
            return _reference()

    b2 = b.reshape(1, Dout)
    n_i = B // tm
    n_j = Dout // tn

    if collapse_k:
        grid = (n_i, n_j)
        kernel = _make_fused_kernel(apply_relu, n_col_tiles=n_j, tn=tn)
        in_specs = [
            pl.BlockSpec((tm, Din), lambda i, j: (i, 0)),   # x (LHS + residual)
            pl.BlockSpec((Din, tn), lambda i, j: (0, j)),   # weight
            pl.BlockSpec((1, tn), lambda i, j: (0, j)),     # bias
        ]
        out_specs = pl.BlockSpec((tm, tn), lambda i, j: (i, j))
        scratch_shapes = []
        operands = (x, w, b2)
        dim_sem = ("parallel", "parallel")
        # x fetched once per i (block index constant across inner j); W re-read per i.
        bytes_accessed = itemsize * (
            B * Din + n_i * Din * Dout + n_i * Dout + B * Dout
        )
    else:
        n_k = Din // tk
        grid = (n_i, n_j, n_k)
        kernel = _make_ksplit_kernel(apply_relu)
        in_specs = [
            pl.BlockSpec((tm, tk), lambda i, j, k: (i, k)),   # x (LHS)
            pl.BlockSpec((tk, tn), lambda i, j, k: (k, j)),   # weight
            pl.BlockSpec((1, tn), lambda i, j, k: (0, j)),    # bias
            pl.BlockSpec((tm, tn), lambda i, j, k: (i, j)),   # residual (x)
        ]
        out_specs = pl.BlockSpec((tm, tn), lambda i, j, k: (i, j))
        scratch_shapes = [pltpu.VMEM((tm, tn), jnp.float32)]
        operands = (x, w, b2, x)
        dim_sem = ("parallel", "parallel", "arbitrary")
        # x re-streamed per j, W re-streamed per i, residual + output once each.
        bytes_accessed = itemsize * (
            n_j * B * Din + n_i * Din * Dout + 2 * B * Dout + n_i * n_j * Dout
        )

    cost = pl.CostEstimate(
        flops=2 * B * Din * Dout + 3 * B * Dout,
        transcendentals=0,
        bytes_accessed=int(bytes_accessed),
    )

    return pl.pallas_call(
        kernel,
        out_shape=jax.ShapeDtypeStruct((B, Dout), x.dtype),
        grid_spec=pltpu.PrefetchScalarGridSpec(
            num_scalar_prefetch=0,
            grid=grid,
            in_specs=in_specs,
            out_specs=out_specs,
            scratch_shapes=scratch_shapes,
        ),
        compiler_params=pltpu.CompilerParams(
            dimension_semantics=dim_sem,
            vmem_limit_bytes=_VMEM_LIMIT_BYTES,
        ),
        cost_estimate=cost,
    )(*operands)


if __name__ == "__main__":
    # --- small shapes consistent with the module: batch=16, hidden=32 ----------
    key = jax.random.PRNGKey(0)
    kx, kw, kb = jax.random.split(key, 3)
    B, D = 16, 32
    x = jax.random.normal(kx, (B, D), dtype=jnp.float32)
    w = jax.random.normal(kw, (D, D), dtype=jnp.float32) * (1.0 / jnp.sqrt(D))
    b = jax.random.normal(kb, (D,), dtype=jnp.float32) * 0.1

    # Force the Pallas path so the kernel is actually exercised at demo scale.
    y = residual_block_linear(x, w, b, activation="relu", use_pallas=True)
    jax.block_until_ready(y)
    y_ref = jnp.maximum(x + x @ w + b, 0.0)
    assert y.shape == (B, D)
    assert jnp.allclose(y, y_ref, atol=1e-5, rtol=1e-5)

    # --- slightly larger shape to exercise the tiled / collapsed-K path --------
    k2 = jax.random.PRNGKey(1)
    kx2, kw2, kb2 = jax.random.split(k2, 3)
    B2, D2 = 256, 512
    x2 = jax.random.normal(kx2, (B2, D2), dtype=jnp.float32)
    w2 = jax.random.normal(kw2, (D2, D2), dtype=jnp.float32) * (1.0 / jnp.sqrt(D2))
    b2 = jax.random.normal(kb2, (D2,), dtype=jnp.float32) * 0.1

    y2 = residual_block_linear(x2, w2, b2, activation="relu")
    jax.block_until_ready(y2)
    y2_ref = jnp.maximum(
        x2 + jnp.dot(x2, w2, precision=jax.lax.Precision.HIGHEST) + b2, 0.0
    )
    assert y2.shape == (B2, D2)
    assert jnp.allclose(y2, y2_ref, atol=1e-3, rtol=1e-3)

    print("KERNEL_OK")
</pallas_src>

<mosaic_0001>
module attributes {stable_mosaic.version = 11 : i64} {
  func.func @kernel(%arg0: i32, %arg1: i32, %arg2: memref<16x32xf32, #tpu.memory_space<vmem>>, %arg3: memref<32x32xf32, #tpu.memory_space<vmem>>, %arg4: memref<1x32xf32, #tpu.memory_space<vmem>>, %arg5: memref<16x32xf32, #tpu.memory_space<vmem>>) attributes {dimension_semantics = [#tpu.dimension_semantics<parallel>, #tpu.dimension_semantics<parallel>], iteration_bounds = array<i64: 1, 1>, scalar_prefetch = 0 : i64, scratch_operands = 0 : i64, tpu.core_type = #tpu.core_type<tc>, window_params = [{transform_indices = @transform_0, window_bounds = array<i64: 16, 32>}, {transform_indices = @transform_1, window_bounds = array<i64: 32, 32>}, {transform_indices = @transform_2, window_bounds = array<i64: 1, 32>}, {transform_indices = @transform_3, window_bounds = array<i64: 16, 32>}]} {
    %c0 = arith.constant 0 : index
    %c0_0 = arith.constant 0 : index
    %0 = vector.load %arg2[%c0, %c0_0] : memref<16x32xf32, #tpu.memory_space<vmem>>, vector<16x32xf32>
    %c0_1 = arith.constant 0 : index
    %c0_2 = arith.constant 0 : index
    %1 = vector.load %arg3[%c0_1, %c0_2] : memref<32x32xf32, #tpu.memory_space<vmem>>, vector<32x32xf32>
    %cst = arith.constant dense<0.000000e+00> : vector<16x32xf32>
    %2 = tpu.matmul %0, %1, %cst {dimension_numbers = #tpu.dot_dimension_numbers<[1], [0], [0], [1], [0, 0, 1, 1], [], []>} : vector<16x32xf32>, vector<32x32xf32>, vector<16x32xf32> -> vector<16x32xf32>
    %c0_3 = arith.constant 0 : index
    %c0_4 = arith.constant 0 : index
    %3 = vector.load %arg2[%c0_3, %c0_4] : memref<16x32xf32, #tpu.memory_space<vmem>>, vector<16x32xf32>
    %c0_5 = arith.constant 0 : index
    %c0_6 = arith.constant 0 : index
    %4 = vector.load %arg4[%c0_5, %c0_6] : memref<1x32xf32, #tpu.memory_space<vmem>>, vector<1x32xf32>
    %5 = vector.broadcast %4 : vector<1x32xf32> to vector<16x32xf32>
    %6 = arith.addf %2, %5 : vector<16x32xf32>
    %7 = arith.addf %6, %3 : vector<16x32xf32>
    %cst_7 = arith.constant 0.000000e+00 : f32
    %8 = vector.broadcast %cst_7 : f32 to vector<16x32xf32>
    %9 = arith.maximumf %7, %8 : vector<16x32xf32>
    %c0_8 = arith.constant 0 : index
    %c0_9 = arith.constant 0 : index
    %10 = vector.load %arg5[%c0_8, %c0_9] : memref<16x32xf32, #tpu.memory_space<vmem>>, vector<16x32xf32>
    tpu.vector_store %arg5[%c0_8, %c0_9], %9 {strides = array<i32>} : memref<16x32xf32, #tpu.memory_space<vmem>>, vector<16x32xf32>,
    return
  }
  func.func @transform_0(%arg0: i32, %arg1: i32) -> (i32, i32) {
    %c0_i32 = arith.constant 0 : i32
    %c0_i32_0 = arith.constant 0 : i32
    return %arg0, %c0_i32 : i32, i32
  }
  func.func @transform_1(%arg0: i32, %arg1: i32) -> (i32, i32) {
    %c0_i32 = arith.constant 0 : i32
    %c0_i32_0 = arith.constant 0 : i32
    return %c0_i32, %arg1 : i32, i32
  }
  func.func @transform_2(%arg0: i32, %arg1: i32) -> (i32, i32) {
    %c0_i32 = arith.constant 0 : i32
    %c0_i32_0 = arith.constant 0 : i32
    return %c0_i32, %arg1 : i32, i32
  }
  func.func @transform_3(%arg0: i32, %arg1: i32) -> (i32, i32) {
    %c0_i32 = arith.constant 0 : i32
    return %arg0, %arg1 : i32, i32
  }
}

</mosaic_0001>

<llo_original>
// kernel: tpu_custom_call.1
$region0: #{tpu_custom_call.1}
  #allocation0 [shape = 'u32[]', space=smem, size = 0x4, offset = 0x4, fixed_abs, tag = 'smem constant byte address 0x4 - core index']
  #allocation1 [shape = 'u32[144,128]{1,0:T(1,128)}', space=vmem, size = 0x12000, scoped, tag = 'internal scratch']
  %s0 = inlined_call_operand.hbm [shape: f32[16,32], index: 0, kind: input, shape index: {}]
  %s1 = inlined_call_operand.hbm [shape: f32[32,32], index: 1, kind: input, shape index: {}]
  %s2 = inlined_call_operand.vmem [shape: f32[1,32], index: 2, kind: input, shape index: {}]
  %s3 = inlined_call_operand.hbm [shape: f32[16,32], index: 3, kind: output, shape index: {}]
  %s4 = sld [smem:[#allocation0]]
  $region30: #{tpu_custom_call.1} parent=0
    _
  %s6 = ssub.s32 1, %s4
  %s7 = scalar_select 0, %s6, %s4
  $region1: #{tpu_custom_call.1} parent=0
    #allocation2 [shape = 'u8[8192]{0}', space=vmem, size = 0x2000, scoped, tag = 'input window, operand 0, single buffered']
    #allocation3 [shape = 's32[1]{0}', space=sflag, size = 0x4, scoped, tag = 'scoped memory for tpu_custom_call.1']
    #allocation4 [shape = 's32[1]{0}', space=sflag, size = 0x4, scoped, tag = 'scoped memory for tpu_custom_call.1']
    #allocation5 [shape = 'u8[16384]{0}', space=vmem, size = 0x4000, scoped, tag = 'input window, operand 1, single buffered']
    #allocation6 [shape = 's32[1]{0}', space=sflag, size = 0x4, scoped, tag = 'scoped memory for tpu_custom_call.1']
    #allocation7 [shape = 'u8[8192]{0}', space=vmem, size = 0x2000, scoped, tag = 'output window, operand 0, single buffered']
    %8 = vsyncpa [#allocation3], 0
    %9 = vsyncpa [#allocation6], 0
    %10 = vsyncpa [#allocation4], 0
    // Predicated region
    $region2: #{tpu_custom_call.1} parent=1 // pred_check
      _
    $region3: #{tpu_custom_call.1} parent=1 // pred_check_branch
      %12 = sbr.rel (0) target = $region5
    $region4: #{tpu_custom_call.1} parent=1 // pred_region
      %s14 = ssub.s32 256, 256
      %15 = vsyncadd [#allocation3], %s14
      %s16 = sshll.u32 [#allocation2], 4
      %s17 = int_to_ptr.vmem [resolvable:$true] %s16
      %22 = dma.hbm_to_vmem [thread:$0]  %s0, 256, %s17, [#allocation3], 128, 128, 8
    $region5: #{tpu_custom_call.1} parent=1 // pred_fallthru
      _
    // Predicated region
    $region6: #{tpu_custom_call.1} parent=1 // pred_check
      _
    $region7: #{tpu_custom_call.1} parent=1 // pred_check_branch
      %24 = sbr.rel (0) target = $region9
    $region8: #{tpu_custom_call.1} parent=1 // pred_region
      %s26 = ssub.s32 512, 512
      %27 = vsyncadd [#allocation6], %s26
      %s28 = sshll.u32 [#allocation5], 4
      %s29 = int_to_ptr.vmem [resolvable:$true] %s28
      %34 = dma.hbm_to_vmem [thread:$0]  %s1, 512, %s29, [#allocation6], 128, 128, 8
    $region9: #{tpu_custom_call.1} parent=1 // pred_fallthru
      _
    // Predicated region
    $region10: #{tpu_custom_call.1} parent=1 // pred_check
      _
    $region11: #{tpu_custom_call.1} parent=1 // pred_check_branch
      %36 = sbr.rel (0) target = $region13
    $region12: #{tpu_custom_call.1} parent=1 // pred_region
      _
    $region13: #{tpu_custom_call.1} parent=1 // pred_fallthru
      _
    // Predicated region
    $region14: #{tpu_custom_call.1} parent=1 // pred_check
      _
    $region15: #{tpu_custom_call.1} parent=1 // pred_check_branch
      %38 = sbr.rel (0) target = $region17
    $region16: #{tpu_custom_call.1} parent=1 // pred_region
      %39 = dma.done [#allocation3], 256
    $region17: #{tpu_custom_call.1} parent=1 // pred_fallthru
      _
    // Predicated region
    $region18: #{tpu_custom_call.1} parent=1 // pred_check
      _
    $region19: #{tpu_custom_call.1} parent=1 // pred_check_branch
      %41 = sbr.rel (0) target = $region21
    $region20: #{tpu_custom_call.1} parent=1 // pred_region
      %42 = dma.done [#allocation6], 512
    $region21: #{tpu_custom_call.1} parent=1 // pred_fallthru
      _
    %v43 = vld [vmem:[#allocation2] sm:$0xff]
    %v44 = vld [vmem:[#allocation2 + $0x8] sm:$0xff]
    %v45 = vld [vmem:[#allocation5] sm:$0xff]
    %v46 = vld [vmem:[#allocation5 + $0x8] sm:$0xff]
    %v47 = vld [vmem:[#allocation5 + $0x10] sm:$0xff]
    %v48 = vld [vmem:[#allocation5 + $0x18] sm:$0xff]
    %v49 = vld [vmem:[%s2] sm:$0x1]
    %v51 = vlaneseq
    %v52 = vshrl.u32 %v51, 7
    %v53 = vsub.s32 0, %v52
    %v54 = vrot.slane %v49, %v53
    %vm56 = vcmask 261120
    %v58 = vsel %vm56, %v43, 0
    %v61 = vsel %vm56, %v44, 0
    %63 = vmatprep.subr.mxu0 0.0
    %64 = vmatpush1.msra.mxu0 %v45
    %65 = vmatprep.subr.mxu0 0.0
    %66 = vmatpush1.msra.mxu0 %v46
    %67 = vmatprep.subr.mxu0 0.0
    %68 = vmatpush1.msra.mxu0 %v47
    %69 = vmatprep.subr.mxu0 0.0
    %70 = vmatpush1.msra.mxu0 %v48
    %71 = vmatprep.subr.mxu0 0.0
    %72 = vmatpush1.msra.mxu0 0.0
    %73 = vmatprep.subr.mxu0 0.0
    %74 = vmatpush1.msra.mxu0 0.0
    %75 = vmatprep.subr.mxu0 0.0
    %76 = vmatpush1.msra.mxu0 0.0
    %77 = vmatprep.subr.mxu0 0.0
    %78 = vmatpush1.msra.mxu0 0.0
    %79 = vmatprep.subr.mxu0 0.0
    %80 = vmatpush1.msra.mxu0 0.0
    %81 = vmatprep.subr.mxu0 0.0
    %82 = vmatpush1.msra.mxu0 0.0
    %83 = vmatprep.subr.mxu0 0.0
    %84 = vmatpush1.msra.mxu0 0.0
    %85 = vmatprep.subr.mxu0 0.0
    %86 = vmatpush1.msra.mxu0 0.0
    %87 = vmatprep.subr.mxu0 0.0
    %88 = vmatpush1.msra.mxu0 0.0
    %89 = vmatprep.subr.mxu0 0.0
    %90 = vmatpush1.msra.mxu0 0.0
    %91 = vmatprep.subr.mxu0 0.0
    %92 = vmatpush1.msra.mxu0 0.0
    %93 = vmatprep.subr.mxu0 0.0
    %94 = vmatpush1.msra.mxu0 0.0
    %95 = vmatprep.subr.mxu0 0.0
    %96 = vmatpush1.msra.mxu0 0.0
    %97 = vmatprep.subr.mxu0 0.0
    %98 = vmatpush1.msra.mxu0 0.0
    %99 = vmatprep.subr.mxu0 0.0
    %100 = vmatpush1.msra.mxu0 0.0
    %101 = vmatprep.subr.mxu0 0.0
    %102 = vmatpush1.msra.mxu0 0.0
    %103 = vmatprep.subr.mxu0 0.0
    %104 = vmatpush1.msra.mxu0 0.0
    %105 = vmatprep.subr.mxu0 0.0
    %106 = vmatpush1.msra.mxu0 0.0
    %107 = vmatprep.subr.mxu0 0.0
    %108 = vmatpush1.msra.mxu0 0.0
    %109 = vmatprep.subr.mxu0 0.0
    %110 = vmatpush1.msra.mxu0 0.0
    %111 = vmatprep.subr.mxu0 0.0
    %112 = vmatpush1.msra.mxu0 0.0
    %113 = vmatprep.subr.mxu0 0.0
    %114 = vmatpush1.msra.mxu0 0.0
    %115 = vmatprep.subr.mxu0 0.0
    %116 = vmatpush1.msra.mxu0 0.0
    %117 = vmatprep.subr.mxu0 0.0
    %118 = vmatpush1.msra.mxu0 0.0
    %119 = vmatprep.subr.mxu0 0.0
    %120 = vmatpush1.msra.mxu0 0.0
    %121 = vmatprep.subr.mxu0 0.0
    %122 = vmatpush1.msra.mxu0 0.0
    %123 = vmatprep.subr.mxu0 0.0
    %124 = vmatpush1.msra.mxu0 0.0
    %125 = vmatprep.subr.mxu0 0.0
    %126 = vmatpush1.msra.mxu0 0.0
    %127 = vmatprep.mubr.f32.mxu0 0.0
    %128 = vmatmul.mubr.f32.gmra.mrb[0].mxu0 %v58
    %v129 = vpop.f32.mrb[0].mxu0
    %v130 = vadd.f32 %v54, %v129
    %v131 = vpop.f32.mrb[0].mxu0
    %132 = vmatprep.mubr.f32.mxu0 0.0
    %133 = vmatmul.mubr.f32.gmra.mrb[0].mxu0 %v61
    %v134 = vpop.f32.mrb[0].mxu0
    %v135 = vadd.f32 %v54, %v134
    %v136 = vpop.f32.mrb[0].mxu0
    %137 = vdwg.mxu0
    %v138 = vadd.f32 %v130, %v43
    %v139 = vadd.f32 %v135, %v44
    %v140 = vmax.f32 %v138, 0.0
    %v141 = vmax.f32 %v139, 0.0
    %142 = vst.msk [vmem:[#allocation7] sm:$0xff] %vm56, %v140
    %143 = vst.msk [vmem:[#allocation7 + $0x8] sm:$0xff] %vm56, %v141
    // Predicated region
    $region22: #{tpu_custom_call.1} parent=1 // pred_check
      _
    $region23: #{tpu_custom_call.1} parent=1 // pred_check_branch
      %145 = sbr.rel (0) target = $region25
    $region24: #{tpu_custom_call.1} parent=1 // pred_region
      %s147 = ssub.s32 256, 256
      %148 = vsyncadd [#allocation4], %s147
      %s149 = sshll.u32 [#allocation7], 4
      %s150 = int_to_ptr.vmem [resolvable:$true] %s149
      %155 = dma.vmem_to_hbm [thread:$0]  %s150, 256, %s3, [#allocation4], 128, 128, 8
    $region25: #{tpu_custom_call.1} parent=1 // pred_fallthru
      _
    // Predicated region
    $region26: #{tpu_custom_call.1} parent=1 // pred_check
      _
    $region27: #{tpu_custom_call.1} parent=1 // pred_check_branch
      %157 = sbr.rel (0) target = $region29
    $region28: #{tpu_custom_call.1} parent=1 // pred_region
      %158 = dma.done [#allocation4], 256
    $region29: #{tpu_custom_call.1} parent=1 // pred_fallthru
      _
    %159 = vsyncpa [#allocation3], 1
    %160 = vsyncpa [#allocation6], 1
    %161 = vsyncpa [#allocation4], 1

</llo_original>
